<compile_context>
chip_gen: v7x
topology: tpu7x:2x2x1
jax: 0.10.0
libtpu: 0.0.40
codegen_flags: <defaults>
</compile_context>

<pallas_src>
import functools

import jax
import jax.numpy as jnp
from jax.experimental import pallas as pl
from jax.experimental.pallas import tpu as pltpu


# ----------------------------- kernels --------------------------------------


def _affine_kernel(x_ref, scale_ref, shift_ref, z_ref):
    """z = scale * x + shift  (per-row scale/shift), no mask."""
    x = x_ref[...].astype(jnp.float32)               # (rt, tt)
    scale = scale_ref[...].astype(jnp.float32)       # (rt, 1)
    shift = shift_ref[...].astype(jnp.float32)       # (rt, 1)
    z = scale * x + shift
    z_ref[...] = z.astype(z_ref.dtype)


def _affine_mask_kernel(x_ref, scale_ref, shift_ref, len_ref, z_ref, *, t_tile):
    """z = (scale * x + shift) masked to columns < per-row length."""
    x = x_ref[...].astype(jnp.float32)               # (rt, tt)
    scale = scale_ref[...].astype(jnp.float32)       # (rt, 1)
    shift = shift_ref[...].astype(jnp.float32)       # (rt, 1)
    z = scale * x + shift
    # Synthesize the sequence mask in-kernel from per-row lengths (no mask HBM
    # stream).  Column index = global T offset of this tile + lane iota.
    col = jax.lax.broadcasted_iota(jnp.int32, x.shape, 1) + pl.program_id(1) * t_tile
    z = jnp.where(col < len_ref[...], z, 0.0)
    z_ref[...] = z.astype(z_ref.dtype)


# ----------------------------- tiling ---------------------------------------


def _choose_tile(R, T, itemsize):
    """Pick (row_tile, t_tile) targeting ~2 MiB of x per block.

    Rows tile in multiples of 8 (sublanes), T in multiples of 128 (lanes);
    full-extent tiles are used when the array dim is smaller than the pack.
    2 MiB blocks keep double-buffered x+z (~4x block) under the 16 MiB v5e
    scoped-VMEM default while reaching ~85% of HBM roofline.
    """
    LANE, SUB = 128, 8
    target = 2 * 1024 * 1024  # bytes of x per block

    if T <= LANE:
        tt = T  # full extent (allowed by the (8,128) rule)
    else:
        t_pad = -(-T // LANE) * LANE
        budget_tt = max(LANE, (target // max(1, SUB * itemsize)) // LANE * LANE)
        tt = min(t_pad, budget_tt)

    if R <= SUB:
        rt = R  # full extent
    else:
        r_pad = -(-R // SUB) * SUB
        budget_rt = max(SUB, (target // max(1, tt * itemsize)) // SUB * SUB)
        rt = min(r_pad, budget_rt)
    return rt, tt


# ----------------------------- wrapper ---------------------------------------


def actnorm_forward(x, x_mask, logs, bias, reverse=False, x_lengths=None):
    """ActNorm forward (initialized=True path).  Returns (z, logdet).

    x:        (B, C, T)
    x_mask:   (B, 1, T) left-aligned binary sequence mask, or None
    logs/bias:(1, C, 1) parameters
    x_lengths:(B,) optional per-batch valid lengths (preferred over x_mask —
              avoids a wrapper-side reduction over the mask).
    """
    B, C, T = x.shape
    logs_f = jnp.reshape(logs.astype(jnp.float32), (1, C, 1))
    bias_f = jnp.reshape(bias.astype(jnp.float32), (1, C, 1))
    logs_sum = jnp.sum(logs_f)

    # Fold the transform into a single per-channel FMA (no exp in the kernel):
    #   forward: z = exp(logs)*x + bias
    #   reverse: z = exp(-logs)*x + (-bias*exp(-logs))
    if reverse:
        scale_c = jnp.exp(-logs_f)
        shift_c = -bias_f * scale_c
        logdet_scale = -logs_sum
    else:
        scale_c = jnp.exp(logs_f)
        shift_c = bias_f
        logdet_scale = logs_sum

    # Per-batch valid lengths (masking + logdet).
    if x_lengths is not None:
        lengths = x_lengths.astype(jnp.int32)                      # (B,)
        masked = True
    elif x_mask is not None:
        # TODO(synk): assumes x_mask is a left-aligned binary sequence mask (as in
        # Glow-TTS); arbitrary masks are not reconstructible from lengths alone.
        x_len_f = jnp.sum(x_mask.astype(jnp.float32), axis=(1, 2))  # (B,)
        lengths = jnp.round(x_len_f).astype(jnp.int32)
        masked = True
    else:
        lengths = None
        masked = False

    x_len = lengths.astype(jnp.float32) if masked else jnp.full((B,), float(T), jnp.float32)
    logdet = logdet_scale * x_len                                   # (B,)

    # 2-D layout: (B*C, T).  Reshape is free (T contiguous); per-row params are tiny.
    R = B * C
    x2 = jnp.reshape(x, (R, T))
    scale_r = jnp.reshape(jnp.tile(scale_c[0, :, 0], (B,)), (R, 1))  # (R, 1) f32
    shift_r = jnp.reshape(jnp.tile(shift_c[0, :, 0], (B,)), (R, 1))  # (R, 1) f32

    rt, tt = _choose_tile(R, T, jnp.dtype(x.dtype).itemsize)
    grid = (pl.cdiv(R, rt), pl.cdiv(T, tt))

    x_spec = pl.BlockSpec((rt, tt), lambda r, t: (r, t))
    p_spec = pl.BlockSpec((rt, 1), lambda r, t: (r, 0))
    out_spec = pl.BlockSpec((rt, tt), lambda r, t: (r, t))

    if masked:
        len_r = jnp.reshape(jnp.repeat(lengths, C), (R, 1))          # (R, 1) int32
        kernel = functools.partial(_affine_mask_kernel, t_tile=tt)
        in_specs = [x_spec, p_spec, p_spec, p_spec]
        args = (x2, scale_r, shift_r, len_r)
    else:
        kernel = _affine_kernel
        in_specs = [x_spec, p_spec, p_spec]
        args = (x2, scale_r, shift_r)

    z2 = pl.pallas_call(
        kernel,
        grid=grid,
        in_specs=in_specs,
        out_specs=out_spec,
        out_shape=jax.ShapeDtypeStruct((R, T), x.dtype),
        compiler_params=pltpu.CompilerParams(
            dimension_semantics=("parallel", "parallel")),
    )(*args)

    z = jnp.reshape(z2, (B, C, T))
    return z, logdet


# ----------------------------- test ------------------------------------------


if __name__ == "__main__":
    key = jax.random.PRNGKey(0)
    B, C, T = 2, 4, 16
    kx, kl, kb = jax.random.split(key, 3)

    x = jax.random.normal(kx, (B, C, T), jnp.float32)
    # Module __init__ uses zeros for logs/bias; small non-zero values make the
    # numerical check non-trivial.
    logs = 0.1 * jax.random.normal(kl, (1, C, 1), jnp.float32)
    bias = 0.1 * jax.random.normal(kb, (1, C, 1), jnp.float32)

    # Sequence mask with different valid lengths per batch element.
    lengths = jnp.array([T, T // 2], dtype=jnp.int32)
    x_mask = (jnp.arange(T)[None, None, :] < lengths[:, None, None]).astype(jnp.float32)

    # TODO(synk): the data-dependent init (ddi=True) branch mutates parameters in
    # place; only the initialized=True forward path is implemented here.

    # Forward (mask supplied as a mask, the module's native interface).
    z, logdet = actnorm_forward(x, x_mask, logs, bias, reverse=False)
    jax.block_until_ready((z, logdet))

    z_ref = (bias + jnp.exp(logs) * x) * x_mask
    logdet_ref = jnp.sum(logs) * jnp.sum(x_mask, axis=(1, 2))
    assert jnp.allclose(z, z_ref, atol=1e-5, rtol=1e-5), "z mismatch"
    assert jnp.allclose(logdet, logdet_ref, atol=1e-5, rtol=1e-5), "logdet mismatch"

    # Forward with explicit lengths (fast path, no mask reduction in wrapper).
    z_l, logdet_l = actnorm_forward(x, None, logs, bias, reverse=False, x_lengths=lengths)
    jax.block_until_ready((z_l, logdet_l))
    assert jnp.allclose(z_l, z_ref, atol=1e-5, rtol=1e-5), "lengths-path z mismatch"
    assert jnp.allclose(logdet_l, logdet_ref, atol=1e-5, rtol=1e-5), "lengths-path logdet mismatch"

    # Reverse path should undo the forward transform on masked positions.
    x_rec, logdet_rev = actnorm_forward(z, x_mask, logs, bias, reverse=True)
    jax.block_until_ready((x_rec, logdet_rev))
    assert jnp.allclose(x_rec, x * x_mask, atol=1e-5, rtol=1e-5), "reverse mismatch"
    assert jnp.allclose(logdet_rev, -logdet_ref, atol=1e-5, rtol=1e-5), "reverse logdet mismatch"

    # x_mask=None default path (no masking at all inside the kernel).
    z_none, logdet_none = actnorm_forward(x, None, logs, bias, reverse=False)
    jax.block_until_ready((z_none, logdet_none))
    assert jnp.allclose(z_none, bias + jnp.exp(logs) * x, atol=1e-5, rtol=1e-5), "no-mask z mismatch"
    assert jnp.allclose(logdet_none, jnp.sum(logs) * T * jnp.ones((B,)),
                        atol=1e-5, rtol=1e-5), "no-mask logdet mismatch"

    print("KERNEL_OK")
</pallas_src>

<mosaic_0001>
module attributes {stable_mosaic.version = 11 : i64} {
  func.func @_affine_mask_kernel(%arg0: i32, %arg1: i32, %arg2: memref<8x16xf32, #tpu.memory_space<vmem>>, %arg3: memref<8x1xf32, #tpu.memory_space<vmem>>, %arg4: memref<8x1xf32, #tpu.memory_space<vmem>>, %arg5: memref<8x1xi32, #tpu.memory_space<vmem>>, %arg6: memref<8x16xf32, #tpu.memory_space<vmem>>) attributes {dimension_semantics = [#tpu.dimension_semantics<parallel>, #tpu.dimension_semantics<parallel>], iteration_bounds = array<i64: 1, 1>, scalar_prefetch = 0 : i64, scratch_operands = 0 : i64, tpu.core_type = #tpu.core_type<tc>, window_params = [{transform_indices = @transform_0, window_bounds = array<i64: 8, 16>}, {transform_indices = @transform_1, window_bounds = array<i64: 8, 1>}, {transform_indices = @transform_2, window_bounds = array<i64: 8, 1>}, {transform_indices = @transform_3, window_bounds = array<i64: 8, 1>}, {transform_indices = @transform_4, window_bounds = array<i64: 8, 16>}]} {
    %c0 = arith.constant 0 : index
    %c0_0 = arith.constant 0 : index
    %0 = vector.load %arg2[%c0, %c0_0] : memref<8x16xf32, #tpu.memory_space<vmem>>, vector<8x16xf32>
    %c0_1 = arith.constant 0 : index
    %c0_2 = arith.constant 0 : index
    %1 = vector.load %arg3[%c0_1, %c0_2] : memref<8x1xf32, #tpu.memory_space<vmem>>, vector<8x1xf32>
    %c0_3 = arith.constant 0 : index
    %c0_4 = arith.constant 0 : index
    %2 = vector.load %arg4[%c0_3, %c0_4] : memref<8x1xf32, #tpu.memory_space<vmem>>, vector<8x1xf32>
    %3 = vector.broadcast %1 : vector<8x1xf32> to vector<8x16xf32>
    %4 = arith.mulf %3, %0 : vector<8x16xf32>
    %5 = vector.broadcast %2 : vector<8x1xf32> to vector<8x16xf32>
    %6 = arith.addf %4, %5 : vector<8x16xf32>
    %7 = tpu.iota {dimensions = array<i32: 1>} : vector<8x16xi32>
    %c16_i32 = arith.constant 16 : i32
    %8 = arith.muli %arg1, %c16_i32 : i32
    %9 = vector.broadcast %8 : i32 to vector<8x16xi32>
    %10 = arith.addi %7, %9 : vector<8x16xi32>
    %c0_5 = arith.constant 0 : index
    %c0_6 = arith.constant 0 : index
    %11 = vector.load %arg5[%c0_5, %c0_6] : memref<8x1xi32, #tpu.memory_space<vmem>>, vector<8x1xi32>
    %12 = vector.broadcast %11 : vector<8x1xi32> to vector<8x16xi32>
    %13 = arith.cmpi slt, %10, %12 : vector<8x16xi32>
    %cst = arith.constant 0.000000e+00 : f32
    %14 = vector.broadcast %cst : f32 to vector<8x16xf32>
    %15 = arith.select %13, %6, %14 : vector<8x16xi1>, vector<8x16xf32>
    %c0_7 = arith.constant 0 : index
    %c0_8 = arith.constant 0 : index
    %16 = vector.load %arg6[%c0_7, %c0_8] : memref<8x16xf32, #tpu.memory_space<vmem>>, vector<8x16xf32>
    tpu.vector_store %arg6[%c0_7, %c0_8], %15 {strides = array<i32>} : memref<8x16xf32, #tpu.memory_space<vmem>>, vector<8x16xf32>,
    return
  }
  func.func @transform_0(%arg0: i32, %arg1: i32) -> (i32, i32) {
    %c0_i32 = arith.constant 0 : i32
    return %arg0, %arg1 : i32, i32
  }
  func.func @transform_1(%arg0: i32, %arg1: i32) -> (i32, i32) {
    %c0_i32 = arith.constant 0 : i32
    %c0_i32_0 = arith.constant 0 : i32
    return %arg0, %c0_i32 : i32, i32
  }
  func.func @transform_2(%arg0: i32, %arg1: i32) -> (i32, i32) {
    %c0_i32 = arith.constant 0 : i32
    %c0_i32_0 = arith.constant 0 : i32
    return %arg0, %c0_i32 : i32, i32
  }
  func.func @transform_3(%arg0: i32, %arg1: i32) -> (i32, i32) {
    %c0_i32 = arith.constant 0 : i32
    %c0_i32_0 = arith.constant 0 : i32
    return %arg0, %c0_i32 : i32, i32
  }
  func.func @transform_4(%arg0: i32, %arg1: i32) -> (i32, i32) {
    %c0_i32 = arith.constant 0 : i32
    return %arg0, %arg1 : i32, i32
  }
}

</mosaic_0001>

<llo_original>
// kernel: tpu_custom_call.1
$region0: #{tpu_custom_call.1}
  #allocation0 [shape = 'u32[]', space=smem, size = 0x4, offset = 0x4, fixed_abs, tag = 'smem constant byte address 0x4 - core index']
  #allocation1 [shape = 'u32[144,128]{1,0:T(1,128)}', space=vmem, size = 0x12000, scoped, tag = 'internal scratch']
  %s0 = inlined_call_operand.vmem [shape: f32[8,16], index: 0, kind: input, shape index: {}]
  %s1 = inlined_call_operand.vmem [shape: f32[8,1], index: 1, kind: input, shape index: {}]
  %s2 = inlined_call_operand.vmem [shape: f32[8,1], index: 2, kind: input, shape index: {}]
  %s3 = inlined_call_operand.vmem [shape: s32[8,1], index: 3, kind: input, shape index: {}]
  %s4 = inlined_call_operand.hbm [shape: f32[8,16], index: 4, kind: output, shape index: {}]
  %s5 = sld [smem:[#allocation0]]
  $region26: #{tpu_custom_call.1} parent=0
    _
  %s7 = ssub.s32 1, %s5
  %s8 = scalar_select 0, %s7, %s5
  $region1: #{tpu_custom_call.1} parent=0
    #allocation2 [shape = 'u8[4096]{0}', space=vmem, size = 0x1000, scoped, tag = 'output window, operand 0, single buffered']
    #allocation3 [shape = 's32[1]{0}', space=sflag, size = 0x4, scoped, tag = 'scoped memory for tpu_custom_call.1']
    %9 = vsyncpa [#allocation3], 0
    // Predicated region
    $region2: #{tpu_custom_call.1} parent=1 // pred_check
      _
    $region3: #{tpu_custom_call.1} parent=1 // pred_check_branch
      %11 = sbr.rel (0) target = $region5
    $region4: #{tpu_custom_call.1} parent=1 // pred_region
      _
    $region5: #{tpu_custom_call.1} parent=1 // pred_fallthru
      _
    // Predicated region
    $region6: #{tpu_custom_call.1} parent=1 // pred_check
      _
    $region7: #{tpu_custom_call.1} parent=1 // pred_check_branch
      %13 = sbr.rel (0) target = $region9
    $region8: #{tpu_custom_call.1} parent=1 // pred_region
      _
    $region9: #{tpu_custom_call.1} parent=1 // pred_fallthru
      _
    // Predicated region
    $region10: #{tpu_custom_call.1} parent=1 // pred_check
      _
    $region11: #{tpu_custom_call.1} parent=1 // pred_check_branch
      %15 = sbr.rel (0) target = $region13
    $region12: #{tpu_custom_call.1} parent=1 // pred_region
      _
    $region13: #{tpu_custom_call.1} parent=1 // pred_fallthru
      _
    // Predicated region
    $region14: #{tpu_custom_call.1} parent=1 // pred_check
      _
    $region15: #{tpu_custom_call.1} parent=1 // pred_check_branch
      %17 = sbr.rel (0) target = $region17
    $region16: #{tpu_custom_call.1} parent=1 // pred_region
      _
    $region17: #{tpu_custom_call.1} parent=1 // pred_fallthru
      _
    %v18 = vld [vmem:[%s0] sm:$0xff]
    %v19 = vld [vmem:[%s1] sm:$0xff]
    %v20 = vld [vmem:[%s2] sm:$0xff]
    %22 = vset.pattern.permute.xlu0 0
    %23 = vperm.xlu0 %22, %v19
    %v24 = vpop.permute.xlu0 %23
    %v26 = vmul.f32 %v24, %v18
    %28 = vset.pattern.permute.xlu0 0
    %29 = vperm.xlu0 %28, %v20
    %v30 = vpop.permute.xlu0 %29
    %v32 = vadd.f32 %v26, %v30
    %v33 = vlaneseq
    %v34 = vand.u32 %v33, 127
    %s35 = smul.u32 0, 16
    %v36 = vstv %s35
    %v37 = vadd.s32 %v34, %v36
    %v38 = vld [vmem:[%s3] sm:$0xff]
    %39 = vset.pattern.permute.xlu0 0
    %40 = vperm.xlu0 %39, %v38
    %v41 = vpop.permute.xlu0 %40
    %vm42 = vcmp.lt.s32.totalorder %v37, %v41
    %v43 = vsel %vm42, %v32, 0.0
    %vm44 = vcmask 130048
    %45 = vst.msk [vmem:[#allocation2] sm:$0xff] %vm44, %v43
    // Predicated region
    $region18: #{tpu_custom_call.1} parent=1 // pred_check
      _
    $region19: #{tpu_custom_call.1} parent=1 // pred_check_branch
      %47 = sbr.rel (0) target = $region21
    $region20: #{tpu_custom_call.1} parent=1 // pred_region
      %s49 = ssub.s32 128, 128
      %50 = vsyncadd [#allocation3], %s49
      %s52 = sshll.u32 [#allocation2], 4
      %s53 = int_to_ptr.vmem [resolvable:$true] %s52
      %55 = dma.vmem_to_hbm [thread:$0]  %s53, 128, %s4, [#allocation3]
    $region21: #{tpu_custom_call.1} parent=1 // pred_fallthru
      _
    // Predicated region
    $region22: #{tpu_custom_call.1} parent=1 // pred_check
      _
    $region23: #{tpu_custom_call.1} parent=1 // pred_check_branch
      %57 = sbr.rel (0) target = $region25
    $region24: #{tpu_custom_call.1} parent=1 // pred_region
      %58 = dma.done [#allocation3], 128
    $region25: #{tpu_custom_call.1} parent=1 // pred_fallthru
      _
    %59 = vsyncpa [#allocation3], 1

</llo_original>
